<compile_context>
chip_gen: v6e
topology: v6e:2x2x1
jax: 0.10.0
libtpu: 0.0.40
codegen_flags: <defaults>
</compile_context>

<pallas_src>
import functools
import math

import jax
import jax.numpy as jnp
import numpy as np
from jax.experimental import pallas as pl
from jax.experimental.pallas import tpu as pltpu

_LANES = 128
_SUBLANE_FOLD = 8                      # fold each batch row over 8 sublanes
_TARGET_BLOCK_BYTES = 4 * 1024 * 1024  # combined (x + t) bytes per grid step


def _dice_sums_kernel(x_ref, t_ref, num_ref, den_ref):
    """Accumulate lane-wise partial sums of sigmoid(x)*t and sigmoid(x)^2+t^2."""
    j = pl.program_id(1)

    @pl.when(j == 0)
    def _():
        num_ref[...] = jnp.zeros_like(num_ref)
        den_ref[...] = jnp.zeros_like(den_ref)

    x = x_ref[...].astype(jnp.float32)    # (rows, g_block, 128)
    t = t_ref[...].astype(jnp.float32)
    s = jax.nn.sigmoid(x)

    # Reduce only over the middle (sublane-group) axis; keep 128 lanes dense in
    # the accumulator.  The single cross-lane reduce happens in the JAX glue.
    num_ref[...] += jnp.sum(s * t, axis=1)[None, :, :]
    den_ref[...] += jnp.sum(s * s + t * t, axis=1)[None, :, :]


def _dice_partial_sums(x2d, t2d):
    """Per-batch sums of sigmoid(x)*t and sigmoid(x)^2+t^2, each shape (B,)."""
    B, N = x2d.shape
    rows = B * _SUBLANE_FOLD
    chunk = _SUBLANE_FOLD * _LANES                 # elements per batch per group
    n_chunks = -(-N // chunk)                      # cdiv

    # Block size: ~_TARGET_BLOCK_BYTES of combined input per grid step.
    itembytes = x2d.dtype.itemsize + t2d.dtype.itemsize
    g_block = max(8, (_TARGET_BLOCK_BYTES // (rows * _LANES * itembytes)) // 8 * 8)

    if n_chunks <= g_block:
        num_parallel, g_block, steps = 1, n_chunks, 1
    else:
        # Leading parallel axis: use both TensorCores on v7x for large inputs.
        num_parallel = 2 if n_chunks >= 4 * g_block else 1
        steps = -(-n_chunks // (num_parallel * g_block))

    g_total = num_parallel * steps * g_block
    n_pad = g_total * chunk

    if n_pad != N:
        # Sum-safe padding: sigmoid(-1e9) == 0 and target pad == 0, so padded
        # elements add 0 to both numerator and denominator sums.
        x2d = jnp.pad(x2d, ((0, 0), (0, n_pad - N)), constant_values=-1e9)
        t2d = jnp.pad(t2d, ((0, 0), (0, n_pad - N)), constant_values=0)

    # Row-major reshape (free): batch b occupies rows [b*8, (b+1)*8).
    x3d = x2d.reshape(rows, g_total, _LANES)
    t3d = t2d.reshape(rows, g_total, _LANES)

    in_spec = pl.BlockSpec(
        (rows, g_block, _LANES),
        lambda p, j: (0, p * steps + j, 0),
    )
    out_spec = pl.BlockSpec((1, rows, _LANES), lambda p, j: (p, 0, 0))

    num_part, den_part = pl.pallas_call(
        _dice_sums_kernel,
        out_shape=(
            jax.ShapeDtypeStruct((num_parallel, rows, _LANES), jnp.float32),
            jax.ShapeDtypeStruct((num_parallel, rows, _LANES), jnp.float32),
        ),
        grid=(num_parallel, steps),
        in_specs=[in_spec, in_spec],
        out_specs=(out_spec, out_spec),
        compiler_params=pltpu.CompilerParams(
            dimension_semantics=("parallel", "arbitrary"),
            vmem_limit_bytes=32 * 1024 * 1024,
        ),
    )(x3d, t3d)

    # Cheap final reduce: parallel axis + lanes + the 8 folded rows per batch.
    num_b = num_part.sum(axis=(0, 2)).reshape(B, _SUBLANE_FOLD).sum(axis=1)
    den_b = den_part.sum(axis=(0, 2)).reshape(B, _SUBLANE_FOLD).sum(axis=1)
    return num_b, den_b


@functools.partial(
    jax.jit, static_argnames=("eps", "upper_eps", "batch_dice", "loss")
)
def dice_with_logits_loss(
    x,
    target,
    *,
    eps: float = 1e-6,
    upper_eps: bool = False,
    batch_dice: bool = True,
    loss: bool = True,
):
    """JAX/Pallas equivalent of DiceWithLogitsLoss.forward."""
    B = x.shape[0]
    N = math.prod(x.shape[1:])
    # Native dtype straight into the kernel (no wrapper upcast).
    x2d = x.reshape(B, N)
    t2d = target.reshape(B, N)

    num_b, den_b = _dice_partial_sums(x2d, t2d)

    if batch_dice:
        total = float(B) * float(N)
        numerator = 2.0 * jnp.sum(num_b) / total
        if upper_eps:
            numerator = numerator + eps
        denominator = jnp.sum(den_b) / total + eps
        out = numerator / denominator
    else:
        numerator = 2.0 * num_b / float(N)
        if upper_eps:
            numerator = numerator + eps
        denominator = den_b / float(N) + eps
        out = numerator / denominator

    if loss:
        out = 1.0 - out
    return jnp.mean(out)


def _reference(x, target, eps=1e-6, upper_eps=False, batch_dice=True, loss=True):
    """Pure-JAX reference matching the PyTorch forward."""
    s = jax.nn.sigmoid(x.astype(jnp.float32))
    t = target.astype(jnp.float32)
    if batch_dice:
        mean_fn = jnp.mean
    else:
        mean_fn = lambda a: a.reshape(a.shape[0], -1).mean(axis=1)
    numerator = 2.0 * mean_fn(s * t)
    if upper_eps:
        numerator = numerator + eps
    denominator = mean_fn(s * s + t * t) + eps
    out = numerator / denominator
    if loss:
        out = 1.0 - out
    return jnp.mean(out)


if __name__ == "__main__":
    key = jax.random.PRNGKey(0)
    kx, kt, kx2, kt2 = jax.random.split(key, 4)

    # Case 1: NCHW f32, N = C*H*W = 1024 (no padding needed).
    B, C, H, W = 2, 4, 16, 16
    x = jax.random.normal(kx, (B, C, H, W), dtype=jnp.float32)
    target = (jax.random.uniform(kt, (B, C, H, W)) > 0.5).astype(jnp.float32)

    out = jax.block_until_ready(dice_with_logits_loss(x, target))
    ref = _reference(x, target)
    np.testing.assert_allclose(np.asarray(out), np.asarray(ref), rtol=1e-5, atol=1e-6)

    out_bd = jax.block_until_ready(dice_with_logits_loss(x, target, batch_dice=False))
    ref_bd = _reference(x, target, batch_dice=False)
    np.testing.assert_allclose(np.asarray(out_bd), np.asarray(ref_bd), rtol=1e-5, atol=1e-6)

    # Case 2: N = 768 (not a multiple of 1024) -> exercises sum-safe padding.
    B2, C2, H2, W2 = 2, 3, 16, 16
    x2 = jax.random.normal(kx2, (B2, C2, H2, W2), dtype=jnp.float32)
    t2 = (jax.random.uniform(kt2, (B2, C2, H2, W2)) > 0.5).astype(jnp.float32)
    out2 = jax.block_until_ready(
        dice_with_logits_loss(x2, t2, upper_eps=True, batch_dice=False)
    )
    ref2 = _reference(x2, t2, upper_eps=True, batch_dice=False)
    np.testing.assert_allclose(np.asarray(out2), np.asarray(ref2), rtol=1e-5, atol=1e-6)

    # Case 3: bf16 logits stay bf16 on the wire (f32 math only inside the kernel).
    xb = x.astype(jnp.bfloat16)
    out3 = jax.block_until_ready(dice_with_logits_loss(xb, target))
    ref3 = _reference(xb, target)
    np.testing.assert_allclose(np.asarray(out3), np.asarray(ref3), rtol=1e-4, atol=1e-5)

    print("KERNEL_OK")
</pallas_src>

<mosaic_0001>
module attributes {stable_mosaic.version = 11 : i64} {
  func.func @_dice_sums_kernel(%arg0: i32, %arg1: i32, %arg2: memref<16x1x128xf32, #tpu.memory_space<vmem>>, %arg3: memref<16x1x128xf32, #tpu.memory_space<vmem>>, %arg4: memref<1x16x128xf32, #tpu.memory_space<vmem>>, %arg5: memref<1x16x128xf32, #tpu.memory_space<vmem>>) attributes {dimension_semantics = [#tpu.dimension_semantics<parallel>, #tpu.dimension_semantics<arbitrary>], iteration_bounds = array<i64: 1, 1>, scalar_prefetch = 0 : i64, scratch_operands = 0 : i64, tpu.core_type = #tpu.core_type<tc>, window_params = [{transform_indices = @transform_0, window_bounds = array<i64: 16, 1, 128>}, {transform_indices = @transform_1, window_bounds = array<i64: 16, 1, 128>}, {transform_indices = @transform_2, window_bounds = array<i64: 1, 16, 128>}, {transform_indices = @transform_3, window_bounds = array<i64: 1, 16, 128>}]} {
    %c0_i32 = arith.constant 0 : i32
    %0 = arith.cmpi eq, %arg1, %c0_i32 : i32
    %1 = arith.extui %0 : i1 to i32
    %c0_i32_0 = arith.constant 0 : i32
    %2 = arith.cmpi ne, %1, %c0_i32_0 : i32
    scf.if %2 {
      %cst_20 = arith.constant 0.000000e+00 : f32
      %24 = vector.broadcast %cst_20 : f32 to vector<1x16x128xf32>
      %c0_21 = arith.constant 0 : index
      %c0_22 = arith.constant 0 : index
      %c0_23 = arith.constant 0 : index
      %25 = vector.load %arg4[%c0_21, %c0_22, %c0_23] : memref<1x16x128xf32, #tpu.memory_space<vmem>>, vector<1x16x128xf32>
      tpu.vector_store %arg4[%c0_21, %c0_22, %c0_23], %24 {strides = array<i32>} : memref<1x16x128xf32, #tpu.memory_space<vmem>>, vector<1x16x128xf32>,
      %cst_24 = arith.constant 0.000000e+00 : f32
      %26 = vector.broadcast %cst_24 : f32 to vector<1x16x128xf32>
      %c0_25 = arith.constant 0 : index
      %c0_26 = arith.constant 0 : index
      %c0_27 = arith.constant 0 : index
      %27 = vector.load %arg5[%c0_25, %c0_26, %c0_27] : memref<1x16x128xf32, #tpu.memory_space<vmem>>, vector<1x16x128xf32>
      tpu.vector_store %arg5[%c0_25, %c0_26, %c0_27], %26 {strides = array<i32>} : memref<1x16x128xf32, #tpu.memory_space<vmem>>, vector<1x16x128xf32>,
    } else {
    }
    %c0 = arith.constant 0 : index
    %c0_1 = arith.constant 0 : index
    %c0_2 = arith.constant 0 : index
    %3 = vector.load %arg2[%c0, %c0_1, %c0_2] : memref<16x1x128xf32, #tpu.memory_space<vmem>>, vector<16x1x128xf32>
    %c0_3 = arith.constant 0 : index
    %c0_4 = arith.constant 0 : index
    %c0_5 = arith.constant 0 : index
    %4 = vector.load %arg3[%c0_3, %c0_4, %c0_5] : memref<16x1x128xf32, #tpu.memory_space<vmem>>, vector<16x1x128xf32>
    %5 = arith.negf %3 : vector<16x1x128xf32>
    %6 = math.exp %5 : vector<16x1x128xf32>
    %cst = arith.constant 1.000000e+00 : f32
    %7 = vector.broadcast %cst : f32 to vector<16x1x128xf32>
    %8 = arith.addf %7, %6 : vector<16x1x128xf32>
    %9 = arith.divf %7, %8 : vector<16x1x128xf32>
    %c0_6 = arith.constant 0 : index
    %c0_7 = arith.constant 0 : index
    %c0_8 = arith.constant 0 : index
    %10 = vector.load %arg4[%c0_6, %c0_7, %c0_8] : memref<1x16x128xf32, #tpu.memory_space<vmem>>, vector<1x16x128xf32>
    %11 = arith.mulf %9, %4 : vector<16x1x128xf32>
    %cst_9 = arith.constant dense<0.000000e+00> : vector<16x128xf32>
    %12 = vector.multi_reduction <add>, %11, %cst_9 [1] : vector<16x1x128xf32> to vector<16x128xf32>
    %13 = vector.shape_cast %12 : vector<16x128xf32> to vector<1x16x128xf32>
    %14 = arith.addf %10, %13 : vector<1x16x128xf32>
    %c0_10 = arith.constant 0 : index
    %c0_11 = arith.constant 0 : index
    %c0_12 = arith.constant 0 : index
    %15 = vector.load %arg4[%c0_10, %c0_11, %c0_12] : memref<1x16x128xf32, #tpu.memory_space<vmem>>, vector<1x16x128xf32>
    tpu.vector_store %arg4[%c0_10, %c0_11, %c0_12], %14 {strides = array<i32>} : memref<1x16x128xf32, #tpu.memory_space<vmem>>, vector<1x16x128xf32>,
    %c0_13 = arith.constant 0 : index
    %c0_14 = arith.constant 0 : index
    %c0_15 = arith.constant 0 : index
    %16 = vector.load %arg5[%c0_13, %c0_14, %c0_15] : memref<1x16x128xf32, #tpu.memory_space<vmem>>, vector<1x16x128xf32>
    %17 = arith.mulf %9, %9 : vector<16x1x128xf32>
    %18 = arith.mulf %4, %4 : vector<16x1x128xf32>
    %19 = arith.addf %17, %18 : vector<16x1x128xf32>
    %cst_16 = arith.constant dense<0.000000e+00> : vector<16x128xf32>
    %20 = vector.multi_reduction <add>, %19, %cst_16 [1] : vector<16x1x128xf32> to vector<16x128xf32>
    %21 = vector.shape_cast %20 : vector<16x128xf32> to vector<1x16x128xf32>
    %22 = arith.addf %16, %21 : vector<1x16x128xf32>
    %c0_17 = arith.constant 0 : index
    %c0_18 = arith.constant 0 : index
    %c0_19 = arith.constant 0 : index
    %23 = vector.load %arg5[%c0_17, %c0_18, %c0_19] : memref<1x16x128xf32, #tpu.memory_space<vmem>>, vector<1x16x128xf32>
    tpu.vector_store %arg5[%c0_17, %c0_18, %c0_19], %22 {strides = array<i32>} : memref<1x16x128xf32, #tpu.memory_space<vmem>>, vector<1x16x128xf32>,
    return
  }
  func.func @transform_0(%arg0: i32, %arg1: i32) -> (i32, i32, i32) {
    %c1_i32 = arith.constant 1 : i32
    %0 = arith.muli %arg0, %c1_i32 : i32
    %1 = arith.addi %0, %arg1 : i32
    %c0_i32 = arith.constant 0 : i32
    %c0_i32_0 = arith.constant 0 : i32
    %c0_i32_1 = arith.constant 0 : i32
    return %c0_i32, %1, %c0_i32_0 : i32, i32, i32
  }
  func.func @transform_1(%arg0: i32, %arg1: i32) -> (i32, i32, i32) {
    %c1_i32 = arith.constant 1 : i32
    %0 = arith.muli %arg0, %c1_i32 : i32
    %1 = arith.addi %0, %arg1 : i32
    %c0_i32 = arith.constant 0 : i32
    %c0_i32_0 = arith.constant 0 : i32
    %c0_i32_1 = arith.constant 0 : i32
    return %c0_i32, %1, %c0_i32_0 : i32, i32, i32
  }
  func.func @transform_2(%arg0: i32, %arg1: i32) -> (i32, i32, i32) {
    %c0_i32 = arith.constant 0 : i32
    %c0_i32_0 = arith.constant 0 : i32
    %c0_i32_1 = arith.constant 0 : i32
    return %arg0, %c0_i32, %c0_i32_0 : i32, i32, i32
  }
  func.func @transform_3(%arg0: i32, %arg1: i32) -> (i32, i32, i32) {
    %c0_i32 = arith.constant 0 : i32
    %c0_i32_0 = arith.constant 0 : i32
    %c0_i32_1 = arith.constant 0 : i32
    return %arg0, %c0_i32, %c0_i32_0 : i32, i32, i32
  }
}

</mosaic_0001>

<llo_original>
// kernel: dice_with_logits_loss.1
$region0: #{dice_with_logits_loss.1}
  #allocation0 [shape = 'u32[]', space=smem, size = 0x4, offset = 0x4, fixed_abs, tag = 'smem constant byte address 0x4 - core index']
  #allocation1 [shape = 'u32[144,128]{1,0:T(1,128)}', space=vmem, size = 0x12000, scoped, tag = 'internal scratch']
  %s0 = inlined_call_operand.vmem [shape: f32[16,1,128], index: 0, kind: input, shape index: {}]
  %s1 = inlined_call_operand.vmem [shape: f32[16,1,128], index: 1, kind: input, shape index: {}]
  %s2 = inlined_call_operand.vmem [shape: f32[1,16,128], index: 2, kind: output, shape index: {0}]
  %s3 = inlined_call_operand.vmem [shape: f32[1,16,128], index: 3, kind: output, shape index: {1}]
  %4 = xla_tuple %s2, %s3
  %s5 = sld [smem:[#allocation0]]
  $region30: #{dice_with_logits_loss.1} parent=0
    _
  %s7 = ssub.s32 1, %s5
  %s8 = scalar_select 0, %s7, %s5
  // Predicated region
  $region2: #{dice_with_logits_loss.1} parent=0 // pred_check
    _
  $region3: #{dice_with_logits_loss.1} parent=0 // pred_check_branch
    %10 = sbr.rel (0) target = $region5
  $region4: #{dice_with_logits_loss.1} parent=0 // pred_region
    %s11 = sadd.s32 0, 0
    %p12 = scmp.lt.s32.totalorder %s11, 0
    %s13 = scalar_select %p12, %s11, 0
    %s14 = scalar_lea.vmem %s0, %s13
    %s15 = sadd.s32 0, 0
  $region5: #{dice_with_logits_loss.1} parent=0 // pred_fallthru
    _
  // Predicated region
  $region6: #{dice_with_logits_loss.1} parent=0 // pred_check
    _
  $region7: #{dice_with_logits_loss.1} parent=0 // pred_check_branch
    %17 = sbr.rel (0) target = $region9
  $region8: #{dice_with_logits_loss.1} parent=0 // pred_region
    %s18 = sadd.s32 0, 0
    %p19 = scmp.lt.s32.totalorder %s18, 0
    %s20 = scalar_select %p19, %s18, 0
    %s21 = scalar_lea.vmem %s1, %s20
    %s22 = sadd.s32 0, 0
  $region9: #{dice_with_logits_loss.1} parent=0 // pred_fallthru
    _
  %s23 = sadd.s32 0, 0
  %p24 = scmp.lt.s32.totalorder %s23, 0
  %s25 = scalar_select %p24, %s23, 0
  %s26 = scalar_lea.vmem %s0, %s25
  %s27 = sadd.s32 0, 0
  %p28 = scmp.lt.s32.totalorder %s27, 0
  %s29 = scalar_select %p28, %s27, 0
  %s30 = scalar_lea.vmem %s1, %s29
  %s31 = sadd.s32 0, 0
  %p32 = scmp.lt.s32.totalorder %s31, 0
  %s33 = scalar_select %p32, %s31, 0
  %s34 = scalar_lea.vmem %s0, %s33
  %s35 = sadd.s32 0, 0
  %s36 = sadd.s32 0, 0
  %p37 = scmp.lt.s32.totalorder %s36, 0
  %s38 = scalar_select %p37, %s36, 0
  %s39 = scalar_lea.vmem %s1, %s38
  %s40 = sadd.s32 0, 0
  %p41 = scmp.eq.s32.totalorder 0, 0
  // Predicated region
  $region10: #{dice_with_logits_loss.1} parent=0 // pred_check
    %p42 = pneg %p41
  $region11: #{dice_with_logits_loss.1} parent=0 // pred_check_branch
    %44 = sbr.rel (%p42) target = $region13
  $region12: #{dice_with_logits_loss.1} parent=0 // pred_region
    %45 = vst [vmem:[%s2] sm:$0xff] 0.0
    %46 = vst [vmem:[%s2 + $0x8] sm:$0xff] 0.0
    %47 = vst [vmem:[%s3] sm:$0xff] 0.0
    %48 = vst [vmem:[%s3 + $0x8] sm:$0xff] 0.0
  $region13: #{dice_with_logits_loss.1} parent=0 // pred_fallthru
    _
  %v49 = vld [vmem:[%s34] sm:$0x1]
  %v50 = vld [vmem:[%s34 + $0x1] sm:$0x1]
  %v51 = vld [vmem:[%s34 + $0x2] sm:$0x1]
  %v52 = vld [vmem:[%s34 + $0x3] sm:$0x1]
  %v53 = vld [vmem:[%s34 + $0x4] sm:$0x1]
  %v54 = vld [vmem:[%s34 + $0x5] sm:$0x1]
  %v55 = vld [vmem:[%s34 + $0x6] sm:$0x1]
  %v56 = vld [vmem:[%s34 + $0x7] sm:$0x1]
  %v57 = vld [vmem:[%s34 + $0x8] sm:$0x1]
  %v58 = vld [vmem:[%s34 + $0x9] sm:$0x1]
  %v59 = vld [vmem:[%s34 + $0xa] sm:$0x1]
  %v60 = vld [vmem:[%s34 + $0xb] sm:$0x1]
  %v61 = vld [vmem:[%s34 + $0xc] sm:$0x1]
  %v62 = vld [vmem:[%s34 + $0xd] sm:$0x1]
  %v63 = vld [vmem:[%s34 + $0xe] sm:$0x1]
  %v64 = vld [vmem:[%s34 + $0xf] sm:$0x1]
  %v65 = vld [vmem:[%s39] sm:$0x1]
  %v66 = vld [vmem:[%s39 + $0x1] sm:$0x1]
  %v67 = vld [vmem:[%s39 + $0x2] sm:$0x1]
  %v68 = vld [vmem:[%s39 + $0x3] sm:$0x1]
  %v69 = vld [vmem:[%s39 + $0x4] sm:$0x1]
  %v70 = vld [vmem:[%s39 + $0x5] sm:$0x1]
  %v71 = vld [vmem:[%s39 + $0x6] sm:$0x1]
  %v72 = vld [vmem:[%s39 + $0x7] sm:$0x1]
  %v73 = vld [vmem:[%s39 + $0x8] sm:$0x1]
  %v74 = vld [vmem:[%s39 + $0x9] sm:$0x1]
  %v75 = vld [vmem:[%s39 + $0xa] sm:$0x1]
  %v76 = vld [vmem:[%s39 + $0xb] sm:$0x1]
  %v77 = vld [vmem:[%s39 + $0xc] sm:$0x1]
  %v78 = vld [vmem:[%s39 + $0xd] sm:$0x1]
  %v79 = vld [vmem:[%s39 + $0xe] sm:$0x1]
  %v80 = vld [vmem:[%s39 + $0xf] sm:$0x1]
  %v81 = vxor.u32 %v49, 2147483648
  %v82 = vxor.u32 %v50, 2147483648
  %v83 = vxor.u32 %v51, 2147483648
  %v84 = vxor.u32 %v52, 2147483648
  %v85 = vxor.u32 %v53, 2147483648
  %v86 = vxor.u32 %v54, 2147483648
  %v87 = vxor.u32 %v55, 2147483648
  %v88 = vxor.u32 %v56, 2147483648
  %v89 = vxor.u32 %v57, 2147483648
  %v90 = vxor.u32 %v58, 2147483648
  %v91 = vxor.u32 %v59, 2147483648
  %v92 = vxor.u32 %v60, 2147483648
  %v93 = vxor.u32 %v61, 2147483648
  %v94 = vxor.u32 %v62, 2147483648
  %v95 = vxor.u32 %v63, 2147483648
  %v96 = vxor.u32 %v64, 2147483648
  %v97 = vmul.f32 %v81, 1.442695
  %v98 = vpow.pop %v97
  %v99 = vmul.f32 %v82, 1.442695
  %v100 = vpow.pop %v99
  %v101 = vmul.f32 %v83, 1.442695
  %v102 = vpow.pop %v101
  %v103 = vmul.f32 %v84, 1.442695
  %v104 = vpow.pop %v103
  %v105 = vmul.f32 %v85, 1.442695
  %v106 = vpow.pop %v105
  %v107 = vmul.f32 %v86, 1.442695
  %v108 = vpow.pop %v107
  %v109 = vmul.f32 %v87, 1.442695
  %v110 = vpow.pop %v109
  %v111 = vmul.f32 %v88, 1.442695
  %v112 = vpow.pop %v111
  %v113 = vmul.f32 %v89, 1.442695
  %v114 = vpow.pop %v113
  %v115 = vmul.f32 %v90, 1.442695
  %v116 = vpow.pop %v115
  %v117 = vmul.f32 %v91, 1.442695
  %v118 = vpow.pop %v117
  %v119 = vmul.f32 %v92, 1.442695
  %v120 = vpow.pop %v119
  %v121 = vmul.f32 %v93, 1.442695
  %v122 = vpow.pop %v121
  %v123 = vmul.f32 %v94, 1.442695
  %v124 = vpow.pop %v123
  %v125 = vmul.f32 %v95, 1.442695
  %v126 = vpow.pop %v125
  %v127 = vmul.f32 %v96, 1.442695
  %v128 = vpow.pop %v127
  %v129 = vadd.f32 %v98, 1.0
  %v130 = vadd.f32 %v100, 1.0
  %v131 = vadd.f32 %v102, 1.0
  %v132 = vadd.f32 %v104, 1.0
  %v133 = vadd.f32 %v106, 1.0
  %v134 = vadd.f32 %v108, 1.0
  %v135 = vadd.f32 %v110, 1.0
  %v136 = vadd.f32 %v112, 1.0
  %v137 = vadd.f32 %v114, 1.0
  %v138 = vadd.f32 %v116, 1.0
  %v139 = vadd.f32 %v118, 1.0
  %v140 = vadd.f32 %v120, 1.0
  %v141 = vadd.f32 %v122, 1.0
  %v142 = vadd.f32 %v124, 1.0
  %v143 = vadd.f32 %v126, 1.0
  %v144 = vadd.f32 %v128, 1.0
  %v145 = vrcp.pop %v129
  %v146 = vmul.f32 1.0, %v145
  %v147 = vrcp.pop %v130
  %v148 = vmul.f32 1.0, %v147
  %v149 = vrcp.pop %v131
  %v150 = vmul.f32 1.0, %v149
  %v151 = vrcp.pop %v132
  %v152 = vmul.f32 1.0, %v151
  %v153 = vrcp.pop %v133
  %v154 = vmul.f32 1.0, %v153
  %v155 = vrcp.pop %v134
  %v156 = vmul.f32 1.0, %v155
  %v157 = vrcp.pop %v135
  %v158 = vmul.f32 1.0, %v157
  %v159 = vrcp.pop %v136
  %v160 = vmul.f32 1.0, %v159
  %v161 = vrcp.pop %v137
  %v162 = vmul.f32 1.0, %v161
  %v163 = vrcp.pop %v138
  %v164 = vmul.f32 1.0, %v163
  %v165 = vrcp.pop %v139
  %v166 = vmul.f32 1.0, %v165
  %v167 = vrcp.pop %v140
  %v168 = vmul.f32 1.0, %v167
  %v169 = vrcp.pop %v141
  %v170 = vmul.f32 1.0, %v169
  %v171 = vrcp.pop %v142
  %v172 = vmul.f32 1.0, %v171
  %v173 = vrcp.pop %v143
  %v174 = vmul.f32 1.0, %v173
  %v175 = vrcp.pop %v144
  %v176 = vmul.f32 1.0, %v175
  %v177 = vld [vmem:[%s2] sm:$0xff]
  %v178 = vld [vmem:[%s2 + $0x8] sm:$0xff]
  %v179 = vmul.f32 %v146, %v65
  %v180 = vmul.f32 %v148, %v66
  %v181 = vmul.f32 %v150, %v67
  %v182 = vmul.f32 %v152, %v68
  %v183 = vmul.f32 %v154, %v69
  %v184 = vmul.f32 %v156, %v70
  %v185 = vmul.f32 %v158, %v71
  %v186 = vmul.f32 %v160, %v72
  %v187 = vmul.f32 %v162, %v73
  %v188 = vmul.f32 %v164, %v74
  %v189 = vmul.f32 %v166, %v75
  %v190 = vmul.f32 %v168, %v76
  %v191 = vmul.f32 %v170, %v77
  %v192 = vmul.f32 %v172, %v78
  %v193 = vmul.f32 %v174, %v79
  %v194 = vmul.f32 %v176, %v80
  %v195 = vadd.f32 %v179, 0.0
  %v196 = vadd.f32 %v180, 0.0
  %v197 = vadd.f32 %v181, 0.0
  %v198 = vadd.f32 %v182, 0.0
  %v199 = vadd.f32 %v183, 0.0
  %v200 = vadd.f32 %v184, 0.0
  %v201 = vadd.f32 %v185, 0.0
  %v202 = vadd.f32 %v186, 0.0
  %v203 = vadd.f32 %v187, 0.0
  %v204 = vadd.f32 %v188, 0.0
  %v205 = vadd.f32 %v189, 0.0
  %v206 = vadd.f32 %v190, 0.0
  %v207 = vadd.f32 %v191, 0.0
  %v208 = vadd.f32 %v192, 0.0
  %v209 = vadd.f32 %v193, 0.0
  %v210 = vadd.f32 %v194, 0.0
  %v227 = vcombine.low %v195, %v196
  %v228 = vcombine.low %v197, %v198
  %v229 = vcombine.low %v199, %v200
  %v230 = vcombine.low %v201, %v202
  %v232 = vunpack.c.l.s4 1966171168
  %v233 = vunpack.c.0.s8 %v232
  %v234 = vlaneseq
  %v235 = vshrl.u32 %v234, 7
  %v236 = vsub.s32 %v233, %v235
  %v237 = vrot.slane %v227, %v236
  %v239 = vunpack.c.l.s4 1966171168
  %v240 = vunpack.c.0.s8 %v239
  %v241 = vlaneseq
  %v242 = vshrl.u32 %v241, 7
  %v243 = vsub.s32 %v240, %v242
  %v244 = vrot.slane %v228, %v243
  %v246 = vunpack.c.l.s4 1966171168
  %v247 = vunpack.c.0.s8 %v246
  %v248 = vlaneseq
  %v249 = vshrl.u32 %v248, 7
  %v250 = vsub.s32 %v247, %v249
  %v251 = vrot.slane %v229, %v250
  %v253 = vunpack.c.l.s4 1966171168
  %v254 = vunpack.c.0.s8 %v253
  %v255 = vlaneseq
  %v256 = vshrl.u32 %v255, 7
  %v257 = vsub.s32 %v254, %v256
  %v258 = vrot.slane %v230, %v257
  %v259 = vcombine.low %v237, %v244
  %v260 = vcombine.low %v251, %v258
  %v262 = vunpack.c.l.s4 1966171168
  %v263 = vunpack.c.0.s8 %v262
  %v264 = vlaneseq
  %v265 = vshrl.u32 %v264, 7
  %v266 = vsub.s32 %v263, %v265
  %v267 = vrot.slane %v259, %v266
  %v269 = vunpack.c.l.s4 1966171168
  %v270 = vunpack.c.0.s8 %v269
  %v271 = vlaneseq
  %v272 = vshrl.u32 %v271, 7
  %v273 = vsub.s32 %v270, %v272
  %v274 = vrot.slane %v260, %v273
  %v275 = vcombine.low %v267, %v274
  %v276 = vcombine.low %v203, %v204
  %v277 = vcombine.low %v205, %v206
  %v278 = vcombine.low %v207, %v208
  %v279 = vcombine.low %v209, %v210
  %v281 = vunpack.c.l.s4 1966171168
  %v282 = vunpack.c.0.s8 %v281
  %v283 = vlaneseq
  %v284 = vshrl.u32 %v283, 7
  %v285 = vsub.s32 %v282, %v284
  %v286 = vrot.slane %v276, %v285
  %v288 = vunpack.c.l.s4 1966171168
  %v289 = vunpack.c.0.s8 %v288
  %v290 = vlaneseq
  %v291 = vshrl.u32 %v290, 7
  %v292 = vsub.s32 %v289, %v291
  %v293 = vrot.slane %v277, %v292
  %v295 = vunpack.c.l.s4 1966171168
  %v296 = vunpack.c.0.s8 %v295
  %v297 = vlaneseq
  %v298 = vshrl.u32 %v297, 7
  %v299 = vsub.s32 %v296, %v298
  %v300 = vrot.slane %v278, %v299
  %v302 = vunpack.c.l.s4 1966171168
  %v303 = vunpack.c.0.s8 %v302
  %v304 = vlaneseq
  %v305 = vshrl.u32 %v304, 7
  %v306 = vsub.s32 %v303, %v305
  %v307 = vrot.slane %v279, %v306
  %v308 = vcombine.low %v286, %v293
  %v309 = vcombine.low %v300, %v307
  %v311 = vunpack.c.l.s4 1966171168
  %v312 = vunpack.c.0.s8 %v311
  %v313 = vlaneseq
  %v314 = vshrl.u32 %v313, 7
  %v315 = vsub.s32 %v312, %v314
  %v316 = vrot.slane %v308, %v315
  %v318 = vunpack.c.l.s4 1966171168
  %v319 = vunpack.c.0.s8 %v318
  %v320 = vlaneseq
  %v321 = vshrl.u32 %v320, 7
  %v322 = vsub.s32 %v319, %v321
  %v323 = vrot.slane %v309, %v322
  %v324 = vcombine.low %v316, %v323
  %v327 = vadd.f32 %v177, %v275
  %v328 = vadd.f32 %v178, %v324
  %329 = vst [vmem:[%s2] sm:$0xff] %v327
  %330 = vst [vmem:[%s2 + $0x8] sm:$0xff] %v328
  %v331 = vld [vmem:[%s3] sm:$0xff]
  %v332 = vld [vmem:[%s3 + $0x8] sm:$0xff]
  %v333 = vmul.f32 %v146, %v146
  %v334 = vmul.f32 %v148, %v148
  %v335 = vmul.f32 %v150, %v150
  %v336 = vmul.f32 %v152, %v152
  %v337 = vmul.f32 %v154, %v154
  %v338 = vmul.f32 %v156, %v156
  %v339 = vmul.f32 %v158, %v158
  %v340 = vmul.f32 %v160, %v160
  %v341 = vmul.f32 %v162, %v162
  %v342 = vmul.f32 %v164, %v164
  %v343 = vmul.f32 %v166, %v166
  %v344 = vmul.f32 %v168, %v168
  %v345 = vmul.f32 %v170, %v170
  %v346 = vmul.f32 %v172, %v172
  %v347 = vmul.f32 %v174, %v174
  %v348 = vmul.f32 %v176, %v176
  %v349 = vmul.f32 %v65, %v65
  %v350 = vmul.f32 %v66, %v66
  %v351 = vmul.f32 %v67, %v67
  %v352 = vmul.f32 %v68, %v68
  %v353 = vmul.f32 %v69, %v69
  %v354 = vmul.f32 %v70, %v70
  %v355 = vmul.f32 %v71, %v71
  %v356 = vmul.f32 %v72, %v72
  %v357 = vmul.f32 %v73, %v73
  %v358 = vmul.f32 %v74, %v74
  %v359 = vmul.f32 %v75, %v75
  %v360 = vmul.f32 %v76, %v76
  %v361 = vmul.f32 %v77, %v77
  %v362 = vmul.f32 %v78, %v78
  %v363 = vmul.f32 %v79, %v79
  %v364 = vmul.f32 %v80, %v80
  %v365 = vadd.f32 %v333, %v349
  %v366 = vadd.f32 %v334, %v350
  %v367 = vadd.f32 %v335, %v351
  %v368 = vadd.f32 %v336, %v352
  %v369 = vadd.f32 %v337, %v353
  %v370 = vadd.f32 %v338, %v354
  %v371 = vadd.f32 %v339, %v355
  %v372 = vadd.f32 %v340, %v356
  %v373 = vadd.f32 %v341, %v357
  %v374 = vadd.f32 %v342, %v358
  %v375 = vadd.f32 %v343, %v359
  %v376 = vadd.f32 %v344, %v360
  %v377 = vadd.f32 %v345, %v361
  %v378 = vadd.f32 %v346, %v362
  %v379 = vadd.f32 %v347, %v363
  %v380 = vadd.f32 %v348, %v364
  %v381 = vadd.f32 %v365, 0.0
  %v382 = vadd.f32 %v366, 0.0
  %v383 = vadd.f32 %v367, 0.0
  %v384 = vadd.f32 %v368, 0.0
  %v385 = vadd.f32 %v369, 0.0
  %v386 = vadd.f32 %v370, 0.0
  %v387 = vadd.f32 %v371, 0.0
  %v388 = vadd.f32 %v372, 0.0
  %v389 = vadd.f32 %v373, 0.0
  %v390 = vadd.f32 %v374, 0.0
  %v391 = vadd.f32 %v375, 0.0
  %v392 = vadd.f32 %v376, 0.0
  %v393 = vadd.f32 %v377, 0.0
  %v394 = vadd.f32 %v378, 0.0
  %v395 = vadd.f32 %v379, 0.0
  %v396 = vadd.f32 %v380, 0.0
  %v413 = vcombine.low %v381, %v382
  %v414 = vcombine.low %v383, %v384
  %v415 = vcombine.low %v385, %v386
  %v416 = vcombine.low %v387, %v388
  %v418 = vunpack.c.l.s4 1966171168
  %v419 = vunpack.c.0.s8 %v418
  %v420 = vlaneseq
  %v421 = vshrl.u32 %v420, 7
  %v422 = vsub.s32 %v419, %v421
  %v423 = vrot.slane %v413, %v422
  %v425 = vunpack.c.l.s4 1966171168
  %v426 = vunpack.c.0.s8 %v425
  %v427 = vlaneseq
  %v428 = vshrl.u32 %v427, 7
  %v429 = vsub.s32 %v426, %v428
  %v430 = vrot.slane %v414, %v429
  %v432 = vunpack.c.l.s4 1966171168
  %v433 = vunpack.c.0.s8 %v432
  %v434 = vlaneseq
  %v435 = vshrl.u32 %v434, 7
  %v436 = vsub.s32 %v433, %v435
  %v437 = vrot.slane %v415, %v436
  %v439 = vunpack.c.l.s4 1966171168
  %v440 = vunpack.c.0.s8 %v439
  %v441 = vlaneseq
  %v442 = vshrl.u32 %v441, 7
  %v443 = vsub.s32 %v440, %v442
  %v444 = vrot.slane %v416, %v443
  %v445 = vcombine.low %v423, %v430
  %v446 = vcombine.low %v437, %v444
  %v448 = vunpack.c.l.s4 1966171168
  %v449 = vunpack.c.0.s8 %v448
  %v450 = vlaneseq
  %v451 = vshrl.u32 %v450, 7
  %v452 = vsub.s32 %v449, %v451
  %v453 = vrot.slane %v445, %v452
  %v455 = vunpack.c.l.s4 1966171168
  %v456 = vunpack.c.0.s8 %v455
  %v457 = vlaneseq
  %v458 = vshrl.u32 %v457, 7
  %v459 = vsub.s32 %v456, %v458
  %v460 = vrot.slane %v446, %v459
  %v461 = vcombine.low %v453, %v460
  %v462 = vcombine.low %v389, %v390
  %v463 = vcombine.low %v391, %v392
  %v464 = vcombine.low %v393, %v394
  %v465 = vcombine.low %v395, %v396
  %v467 = vunpack.c.l.s4 1966171168
  %v468 = vunpack.c.0.s8 %v467
  %v469 = vlaneseq
  %v470 = vshrl.u32 %v469, 7
  %v471 = vsub.s32 %v468, %v470
  %v472 = vrot.slane %v462, %v471
  %v474 = vunpack.c.l.s4 1966171168
  %v475 = vunpack.c.0.s8 %v474
  %v476 = vlaneseq
  %v477 = vshrl.u32 %v476, 7
  %v478 = vsub.s32 %v475, %v477
  %v479 = vrot.slane %v463, %v478
  %v481 = vunpack.c.l.s4 1966171168
  %v482 = vunpack.c.0.s8 %v481
  %v483 = vlaneseq
  %v484 = vshrl.u32 %v483, 7
  %v485 = vsub.s32 %v482, %v484
  %v486 = vrot.slane %v464, %v485
  %v488 = vunpack.c.l.s4 1966171168
  %v489 = vunpack.c.0.s8 %v488
  %v490 = vlaneseq
  %v491 = vshrl.u32 %v490, 7
  %v492 = vsub.s32 %v489, %v491
  %v493 = vrot.slane %v465, %v492
  %v494 = vcombine.low %v472, %v479
  %v495 = vcombine.low %v486, %v493
  %v497 = vunpack.c.l.s4 1966171168
  %v498 = vunpack.c.0.s8 %v497
  %v499 = vlaneseq
  %v500 = vshrl.u32 %v499, 7
  %v501 = vsub.s32 %v498, %v500
  %v502 = vrot.slane %v494, %v501
  %v504 = vunpack.c.l.s4 1966171168
  %v505 = vunpack.c.0.s8 %v504
  %v506 = vlaneseq
  %v507 = vshrl.u32 %v506, 7
  %v508 = vsub.s32 %v505, %v507
  %v509 = vrot.slane %v495, %v508
  %v510 = vcombine.low %v502, %v509
  %v513 = vadd.f32 %v331, %v461
  %v514 = vadd.f32 %v332, %v510
  %515 = vst [vmem:[%s3] sm:$0xff] %v513
  %516 = vst [vmem:[%s3 + $0x8] sm:$0xff] %v514
  // Predicated region
  $region14: #{dice_with_logits_loss.1} parent=0 // pred_check
    _
  $region15: #{dice_with_logits_loss.1} parent=0 // pred_check_branch
    %518 = sbr.rel (0) target = $region17
  $region16: #{dice_with_logits_loss.1} parent=0 // pred_region
    _
  $region17: #{dice_with_logits_loss.1} parent=0 // pred_fallthru
    _
  // Predicated region
  $region18: #{dice_with_logits_loss.1} parent=0 // pred_check
    _
  $region19: #{dice_with_logits_loss.1} parent=0 // pred_check_branch
    %520 = sbr.rel (0) target = $region21
  $region20: #{dice_with_logits_loss.1} parent=0 // pred_region
    _
  $region21: #{dice_with_logits_loss.1} parent=0 // pred_fallthru
    _
  // Predicated region
  $region22: #{dice_with_logits_loss.1} parent=0 // pred_check
    _
  $region23: #{dice_with_logits_loss.1} parent=0 // pred_check_branch
    %522 = sbr.rel (0) target = $region25
  $region24: #{dice_with_logits_loss.1} parent=0 // pred_region
    _
  $region25: #{dice_with_logits_loss.1} parent=0 // pred_fallthru
    _
  // Predicated region
  $region26: #{dice_with_logits_loss.1} parent=0 // pred_check
    _
  $region27: #{dice_with_logits_loss.1} parent=0 // pred_check_branch
    %524 = sbr.rel (0) target = $region29
  $region28: #{dice_with_logits_loss.1} parent=0 // pred_region
    _
  $region29: #{dice_with_logits_loss.1} parent=0 // pred_fallthru
    _

</llo_original>
